<compile_context>
chip_gen: v7x
topology: tpu7x:2x2x1
jax: 0.10.0
libtpu: 0.0.40
codegen_flags: <defaults>
</compile_context>

<pallas_src>
import jax
import jax.numpy as jnp
from jax.experimental import pallas as pl
from jax.experimental.pallas import tpu as pltpu


def _make_hcn_kernel(has_mask: bool):
    def kernel(*refs):
        if has_mask:
            adj_ref, r2_ref, w_ref, b_ref, mask_ref, out_ref = refs
        else:
            adj_ref, r2_ref, w_ref, b_ref, out_ref = refs
            mask_ref = None

        f32 = jnp.float32
        adj = adj_ref[...]                       # (tB, Ep, Ep), native dtype
        r2 = r2_ref[...]                         # (tB, Ep, K),  native dtype
        w = w_ref[...]                           # (K, F),       native dtype
        b = b_ref[...]                           # (1, F),       f32

        tB, Ep, K = r2.shape
        F = w.shape[-1]

        # Single tall-skinny MXU matmul for all batches in this block:
        # (tB*Ep, K) @ (K, F).  Ep is a multiple of 8 so the reshape is a pure
        # relabeling of sublane-major dims (no data movement).
        h = jnp.dot(r2.reshape(tB * Ep, K), w,
                    preferred_element_type=f32).reshape(tB, Ep, F)

        # deg_inv_sqrt = clamp(sum_j A_ij, 1)^{-1/2}  (f32 VPU/EUP math; note
        # rsqrt is numerically equivalent to clip(...)**-0.5 within 1e-4).
        deg = jnp.sum(adj.astype(f32), axis=-1, keepdims=True)     # (tB, Ep, 1)
        dis = jax.lax.rsqrt(jnp.maximum(deg, f32(1.0)))

        # Folded normalization: D^-1/2 A D^-1/2 h == dis * (A @ (dis * h)).
        h = (h * dis).astype(adj.dtype)                            # column scale
        out = jnp.einsum("bij,bjf->bif", adj, h,
                         preferred_element_type=f32)               # (tB, Ep, F)
        out = out * dis + b                                        # row scale + bias

        if has_mask:
            out = out * mask_ref[...]                              # (tB, Ep, 1)

        out_ref[...] = out.astype(out_ref.dtype)

    return kernel


def _round_up(x: int, m: int) -> int:
    return (x + m - 1) // m * m


def _vmem_budget():
    """Per-generation VMEM budget (bytes) and physical capacity."""
    cap = 64 * 1024 * 1024          # conservative fallback == v7x per-core VMEM
    try:
        cap = int(getattr(pltpu.get_tpu_info(), "vmem_capacity_bytes", cap))
    except Exception:
        pass
    # ~65% of physical: ~83 MiB on v5e/v6e (128 MiB), ~42 MiB on v7x (64 MiB).
    return int(cap * 0.65), cap


def _choose_tile_b(B, Ep, K, F, adj_bytes, r2_bytes, out_bytes, w_bytes,
                   has_mask, budget_bytes):
    """Largest batch tile whose VMEM working set fits the budget while keeping
    at least min(4, B) grid steps (DMA/compute overlap + v7x megacore)."""
    SUB, LANE, F32B = 8, 128, 4
    # Padded VMEM footprint of one batch worth of each pipelined block.
    adj_blk = Ep * _round_up(Ep, LANE) * adj_bytes
    r2_blk = Ep * _round_up(K, LANE) * r2_bytes
    out_blk = Ep * _round_up(F, LANE) * out_bytes
    mask_blk = Ep * LANE * F32B if has_mask else 0
    per_batch = 2 * (adj_blk + r2_blk + out_blk + mask_blk)     # double buffered
    # f32 compute temporaries (h, scaled/accumulated result, deg/dis): live once.
    per_batch += 3 * Ep * _round_up(F, LANE) * F32B + 2 * Ep * LANE * F32B
    # Shared weight/bias blocks (index_map constant, still double buffered).
    fixed = 2 * (_round_up(K, SUB) * _round_up(F, LANE) * w_bytes
                 + SUB * _round_up(F, LANE) * F32B)

    tb_budget = max(1, (budget_bytes - fixed) // max(per_batch, 1))
    min_steps = min(4, B)                        # never collapse the grid to 1
    tb_cap = max(1, B // min_steps)
    tb = max(1, min(B, tb_budget, tb_cap))
    # Prefer a divisor of B (avoids batch padding) unless it halves the tile.
    d = tb
    while d > 1 and B % d:
        d -= 1
    if d >= max(1, tb // 2):
        tb = d
    est = fixed + tb * per_batch
    return tb, est


@jax.jit
def dense_hcn_conv(hodge_adj, rank2, weight, bias=None, mask=None):
    """Pallas implementation of DenseHCNConv.forward.

    hodge_adj: (B, E, E) or (E, E)
    rank2:     (B, E, K) or (E, K)
    weight:    (K, F)
    bias:      (F,) or None
    mask:      optional (B, E)-shaped mask (broadcast over F)
    returns:   (B, E, F) in result_type(hodge_adj, rank2, weight)
    """
    if hodge_adj.ndim == 2:
        hodge_adj = hodge_adj[None]
    if rank2.ndim == 2:
        rank2 = rank2[None]

    B, E, _ = hodge_adj.shape
    K = rank2.shape[-1]
    F = weight.shape[-1]
    out_dtype = jnp.result_type(hodge_adj.dtype, rank2.dtype, weight.dtype)

    # Keep inputs in their native dtype (bf16 goes straight to the MXU);
    # only the tiny bias is forced to f32 for the accumulate/add path.
    adj, r2, w = hodge_adj, rank2, weight
    b2d = (bias if bias is not None
           else jnp.zeros((F,), jnp.float32)).astype(jnp.float32).reshape(1, F)

    # Sublane-align E.  F is intentionally NOT padded (lane masking in-kernel
    # is cheaper than 4x padded HBM writeback + a wrapper slice round trip).
    Ep = _round_up(E, 8)
    if Ep != E:
        adj = jnp.pad(adj, ((0, 0), (0, Ep - E), (0, Ep - E)))
        r2 = jnp.pad(r2, ((0, 0), (0, Ep - E), (0, 0)))

    has_mask = mask is not None
    budget, vmem_cap = _vmem_budget()
    tB, vmem_est = _choose_tile_b(
        B, Ep, K, F, adj.dtype.itemsize, r2.dtype.itemsize,
        jnp.dtype(out_dtype).itemsize, weight.dtype.itemsize, has_mask, budget)

    num_steps = -(-B // tB)
    Bp = num_steps * tB
    if Bp != B:                       # only when no good divisor of B exists
        adj = jnp.pad(adj, ((0, Bp - B), (0, 0), (0, 0)))
        r2 = jnp.pad(r2, ((0, Bp - B), (0, 0), (0, 0)))

    inputs = [adj, r2, w, b2d]
    in_specs = [
        pl.BlockSpec((tB, Ep, Ep), lambda i: (i, 0, 0)),   # hodge_adj
        pl.BlockSpec((tB, Ep, K), lambda i: (i, 0, 0)),    # rank2
        pl.BlockSpec((K, F), lambda i: (0, 0)),            # weight (shared)
        pl.BlockSpec((1, F), lambda i: (0, 0)),            # bias   (shared)
    ]
    if has_mask:
        # (B, Ep, 1): natural layout for a per-row (sublane) scale; the HBM
        # source region is contiguous so this is a single DMA per block.
        m = mask.reshape(B, E).astype(jnp.float32)[..., None]
        if Ep != E:
            m = jnp.pad(m, ((0, 0), (0, Ep - E), (0, 0)))
        if Bp != B:
            m = jnp.pad(m, ((0, Bp - B), (0, 0), (0, 0)))
        inputs.append(m)
        in_specs.append(pl.BlockSpec((tB, Ep, 1), lambda i: (i, 0, 0)))

    vmem_limit = int(min(0.9 * vmem_cap, max(vmem_est + (8 << 20), 32 << 20)))

    out = pl.pallas_call(
        _make_hcn_kernel(has_mask),
        out_shape=jax.ShapeDtypeStruct((Bp, Ep, F), out_dtype),
        grid_spec=pltpu.PrefetchScalarGridSpec(
            num_scalar_prefetch=0,
            grid=(num_steps,),
            in_specs=in_specs,
            out_specs=pl.BlockSpec((tB, Ep, F), lambda i: (i, 0, 0)),
        ),
        compiler_params=pltpu.CompilerParams(
            dimension_semantics=("parallel",),
            vmem_limit_bytes=vmem_limit),
    )(*inputs)

    if Bp != B or Ep != E:
        out = out[:B, :E, :]          # only in the unaligned / padded cases
    return out


def _reference(hodge_adj, rank2, weight, bias, mask=None):
    # Pure-JAX reference mirroring the PyTorch forward (f32 math).
    if hodge_adj.ndim == 2:
        hodge_adj = hodge_adj[None]
    if rank2.ndim == 2:
        rank2 = rank2[None]
    f32 = jnp.float32
    hodge_adj = hodge_adj.astype(f32)
    rank2 = rank2.astype(f32)
    weight = weight.astype(f32)
    B, E, _ = hodge_adj.shape
    out = jnp.matmul(rank2, weight)
    deg_inv_sqrt = jnp.clip(hodge_adj.sum(-1), 1.0, None) ** -0.5
    adj = deg_inv_sqrt[..., :, None] * hodge_adj * deg_inv_sqrt[..., None, :]
    out = jnp.matmul(adj, out)
    if bias is not None:
        out = out + bias.astype(f32)
    if mask is not None:
        out = out * mask.reshape(B, E, 1).astype(f32)
    return out


if __name__ == "__main__":
    # Small synthetic shapes: B=2 batches, E = NC2 = 16 rank-2 cells,
    # in_channels K = 8, out_channels F = 32.
    B, E, K, F = 2, 16, 8, 32

    key = jax.random.PRNGKey(0)
    k_adj, k_r2, k_w, k_mask, k_adj2, k_r22, k_mask2 = jax.random.split(key, 7)

    hodge_adj = jax.random.uniform(k_adj, (B, E, E), dtype=jnp.float32)
    hodge_adj = 0.5 * (hodge_adj + jnp.swapaxes(hodge_adj, -1, -2))
    rank2 = jax.random.normal(k_r2, (B, E, K), dtype=jnp.float32)

    # Deterministic parameter init (matches reset_parameters):
    #   weight: Glorot uniform over (K, F); bias: zeros(F).
    limit = (6.0 / (K + F)) ** 0.5
    weight = jax.random.uniform(k_w, (K, F), minval=-limit, maxval=limit,
                                dtype=jnp.float32)
    bias = jnp.zeros((F,), dtype=jnp.float32)
    mask = (jax.random.uniform(k_mask, (B, E)) > 0.3).astype(jnp.float32)

    # Masked path.
    out = jax.block_until_ready(dense_hcn_conv(hodge_adj, rank2, weight, bias, mask))
    ref = _reference(hodge_adj, rank2, weight, bias, mask)
    assert out.shape == (B, E, F)
    assert out.dtype == jnp.float32
    assert jnp.allclose(out, ref, atol=1e-4, rtol=1e-5)

    # Unmasked path.
    out2 = jax.block_until_ready(dense_hcn_conv(hodge_adj, rank2, weight, bias))
    ref2 = _reference(hodge_adj, rank2, weight, bias)
    assert jnp.allclose(out2, ref2, atol=1e-4, rtol=1e-5)

    # Unaligned E (sublane padding path) and B with tB=1 tiling.
    B2, E2 = 3, 10
    adj2 = jax.random.uniform(k_adj2, (B2, E2, E2), dtype=jnp.float32)
    adj2 = 0.5 * (adj2 + jnp.swapaxes(adj2, -1, -2))
    r22 = jax.random.normal(k_r22, (B2, E2, K), dtype=jnp.float32)
    mask2 = (jax.random.uniform(k_mask2, (B2, E2)) > 0.3).astype(jnp.float32)
    out3 = jax.block_until_ready(dense_hcn_conv(adj2, r22, weight, bias, mask2))
    ref3 = _reference(adj2, r22, weight, bias, mask2)
    assert out3.shape == (B2, E2, F)
    assert jnp.allclose(out3, ref3, atol=1e-4, rtol=1e-5)

    # bf16 inputs stay bf16 end-to-end (no wrapper upcast, bf16 writeback).
    out4 = jax.block_until_ready(dense_hcn_conv(
        hodge_adj.astype(jnp.bfloat16), rank2.astype(jnp.bfloat16),
        weight.astype(jnp.bfloat16), bias, mask))
    assert out4.dtype == jnp.bfloat16
    assert jnp.allclose(out4.astype(jnp.float32), ref, atol=5e-2, rtol=5e-2)

    print("KERNEL_OK")
</pallas_src>

<mosaic_0001>
module attributes {stable_mosaic.version = 11 : i64} {
  func.func @kernel(%arg0: i32, %arg1: memref<1x16x16xf32, #tpu.memory_space<vmem>>, %arg2: memref<1x16x8xf32, #tpu.memory_space<vmem>>, %arg3: memref<8x32xf32, #tpu.memory_space<vmem>>, %arg4: memref<1x32xf32, #tpu.memory_space<vmem>>, %arg5: memref<1x16x1xf32, #tpu.memory_space<vmem>>, %arg6: memref<1x16x32xf32, #tpu.memory_space<vmem>>) attributes {dimension_semantics = [#tpu.dimension_semantics<parallel>], iteration_bounds = array<i64: 2>, scalar_prefetch = 0 : i64, scratch_operands = 0 : i64, tpu.core_type = #tpu.core_type<tc>, window_params = [{transform_indices = @transform_0, window_bounds = array<i64: 1, 16, 16>}, {transform_indices = @transform_1, window_bounds = array<i64: 1, 16, 8>}, {pipeline_mode = #tpu.pipeline_mode<synchronous>, transform_indices = @transform_2, window_bounds = array<i64: 8, 32>}, {pipeline_mode = #tpu.pipeline_mode<synchronous>, transform_indices = @transform_3, window_bounds = array<i64: 1, 32>}, {transform_indices = @transform_4, window_bounds = array<i64: 1, 16, 1>}, {transform_indices = @transform_5, window_bounds = array<i64: 1, 16, 32>}]} {
    %c0 = arith.constant 0 : index
    %c0_0 = arith.constant 0 : index
    %c0_1 = arith.constant 0 : index
    %0 = vector.load %arg1[%c0, %c0_0, %c0_1] : memref<1x16x16xf32, #tpu.memory_space<vmem>>, vector<1x16x16xf32>
    %c0_2 = arith.constant 0 : index
    %c0_3 = arith.constant 0 : index
    %c0_4 = arith.constant 0 : index
    %1 = vector.load %arg2[%c0_2, %c0_3, %c0_4] : memref<1x16x8xf32, #tpu.memory_space<vmem>>, vector<1x16x8xf32>
    %c0_5 = arith.constant 0 : index
    %c0_6 = arith.constant 0 : index
    %2 = vector.load %arg3[%c0_5, %c0_6] : memref<8x32xf32, #tpu.memory_space<vmem>>, vector<8x32xf32>
    %c0_7 = arith.constant 0 : index
    %c0_8 = arith.constant 0 : index
    %3 = vector.load %arg4[%c0_7, %c0_8] : memref<1x32xf32, #tpu.memory_space<vmem>>, vector<1x32xf32>
    %4 = vector.shape_cast %1 : vector<1x16x8xf32> to vector<16x8xf32>
    %cst = arith.constant dense<0.000000e+00> : vector<16x32xf32>
    %5 = tpu.matmul %4, %2, %cst {dimension_numbers = #tpu.dot_dimension_numbers<[1], [0], [0], [1], [0, 0, 1, 1], [], []>} : vector<16x8xf32>, vector<8x32xf32>, vector<16x32xf32> -> vector<16x32xf32>
    %6 = vector.shape_cast %5 : vector<16x32xf32> to vector<1x16x32xf32>
    %cst_9 = arith.constant dense<0.000000e+00> : vector<1x16xf32>
    %7 = vector.multi_reduction <add>, %0, %cst_9 [2] : vector<1x16x16xf32> to vector<1x16xf32>
    %8 = vector.shape_cast %7 : vector<1x16xf32> to vector<1x16x1xf32>
    %cst_10 = arith.constant 1.000000e+00 : f32
    %9 = vector.broadcast %cst_10 : f32 to vector<1x16x1xf32>
    %10 = arith.maximumf %8, %9 : vector<1x16x1xf32>
    %11 = math.rsqrt %10 : vector<1x16x1xf32>
    %12 = vector.broadcast %11 : vector<1x16x1xf32> to vector<1x16x32xf32>
    %13 = arith.mulf %6, %12 : vector<1x16x32xf32>
    "tpu.trace_start"() <{level = 10 : i32, message = "bij,bjf->bif"}> : () -> ()
    %cst_11 = arith.constant dense<0.000000e+00> : vector<1x16x32xf32>
    %14 = tpu.matmul %0, %13, %cst_11 {dimension_numbers = #tpu.dot_dimension_numbers<[2], [1], [1], [2], [0, 0, 0, 1, 1, 2], [0], [0]>} : vector<1x16x16xf32>, vector<1x16x32xf32>, vector<1x16x32xf32> -> vector<1x16x32xf32>
    "tpu.trace_stop"() : () -> ()
    %15 = vector.broadcast %11 : vector<1x16x1xf32> to vector<1x16x32xf32>
    %16 = arith.mulf %14, %15 : vector<1x16x32xf32>
    %17 = vector.shape_cast %3 : vector<1x32xf32> to vector<1x1x32xf32>
    %18 = vector.broadcast %17 : vector<1x1x32xf32> to vector<1x16x32xf32>
    %19 = arith.addf %16, %18 : vector<1x16x32xf32>
    %c0_12 = arith.constant 0 : index
    %c0_13 = arith.constant 0 : index
    %c0_14 = arith.constant 0 : index
    %20 = vector.load %arg5[%c0_12, %c0_13, %c0_14] : memref<1x16x1xf32, #tpu.memory_space<vmem>>, vector<1x16x1xf32>
    %21 = vector.broadcast %20 : vector<1x16x1xf32> to vector<1x16x32xf32>
    %22 = arith.mulf %19, %21 : vector<1x16x32xf32>
    %c0_15 = arith.constant 0 : index
    %c0_16 = arith.constant 0 : index
    %c0_17 = arith.constant 0 : index
    %23 = vector.load %arg6[%c0_15, %c0_16, %c0_17] : memref<1x16x32xf32, #tpu.memory_space<vmem>>, vector<1x16x32xf32>
    tpu.vector_store %arg6[%c0_15, %c0_16, %c0_17], %22 {strides = array<i32>} : memref<1x16x32xf32, #tpu.memory_space<vmem>>, vector<1x16x32xf32>,
    return
  }
  func.func @transform_0(%arg0: i32) -> (i32, i32, i32) {
    %c0_i32 = arith.constant 0 : i32
    %c0_i32_0 = arith.constant 0 : i32
    %c0_i32_1 = arith.constant 0 : i32
    return %arg0, %c0_i32, %c0_i32_0 : i32, i32, i32
  }
  func.func @transform_1(%arg0: i32) -> (i32, i32, i32) {
    %c0_i32 = arith.constant 0 : i32
    %c0_i32_0 = arith.constant 0 : i32
    %c0_i32_1 = arith.constant 0 : i32
    return %arg0, %c0_i32, %c0_i32_0 : i32, i32, i32
  }
  func.func @transform_2(%arg0: i32) -> (i32, i32) {
    %c0_i32 = arith.constant 0 : i32
    %c0_i32_0 = arith.constant 0 : i32
    %c0_i32_1 = arith.constant 0 : i32
    return %c0_i32, %c0_i32_0 : i32, i32
  }
  func.func @transform_3(%arg0: i32) -> (i32, i32) {
    %c0_i32 = arith.constant 0 : i32
    %c0_i32_0 = arith.constant 0 : i32
    %c0_i32_1 = arith.constant 0 : i32
    return %c0_i32, %c0_i32_0 : i32, i32
  }
  func.func @transform_4(%arg0: i32) -> (i32, i32, i32) {
    %c0_i32 = arith.constant 0 : i32
    %c0_i32_0 = arith.constant 0 : i32
    %c0_i32_1 = arith.constant 0 : i32
    return %arg0, %c0_i32, %c0_i32_0 : i32, i32, i32
  }
  func.func @transform_5(%arg0: i32) -> (i32, i32, i32) {
    %c0_i32 = arith.constant 0 : i32
    %c0_i32_0 = arith.constant 0 : i32
    %c0_i32_1 = arith.constant 0 : i32
    return %arg0, %c0_i32, %c0_i32_0 : i32, i32, i32
  }
}

</mosaic_0001>

<llo_original>
// kernel: dense_hcn_conv.1
$region0: #{dense_hcn_conv.1}
  #allocation0 [shape = 'u32[]', space=smem, size = 0x4, offset = 0x4, fixed_abs, tag = 'smem constant byte address 0x4 - core index']
  #allocation1 [shape = 'u32[144,128]{1,0:T(1,128)}', space=vmem, size = 0x12000, scoped, tag = 'internal scratch']
  %s0 = inlined_call_operand.vmem [shape: f32[2,16,16], index: 0, kind: input, shape index: {}]
  %s1 = inlined_call_operand.vmem [shape: f32[2,16,8], index: 1, kind: input, shape index: {}]
  %s2 = inlined_call_operand.vmem [shape: f32[8,32], index: 2, kind: input, shape index: {}]
  %s3 = inlined_call_operand.vmem [shape: f32[1,32], index: 3, kind: input, shape index: {}]
  %s4 = inlined_call_operand.vmem [shape: f32[2,16,1], index: 4, kind: input, shape index: {}]
  %s5 = inlined_call_operand.hbm [shape: f32[2,16,32], index: 5, kind: output, shape index: {}]
  %s6 = sld [smem:[#allocation0]]
  $region53: #{dense_hcn_conv.1} parent=0
    _
  %s8 = ssub.s32 1, %s6
  %s9 = scalar_select 0, %s8, %s6
  $region1: #{dense_hcn_conv.1} parent=0
    #allocation2 [shape = 'u8[16384]{0}', space=vmem, size = 0x4000, scoped, tag = 'output window, operand 0']
    #allocation3 [shape = 's32[2]{0}', space=sflag, size = 0x8, scoped, tag = 'scoped memory for dense_hcn_conv.1']
    %10 = vsyncpa [#allocation3], 0
    %s11 = scalar_lea.sflag [#allocation3], 1
    %12 = vsyncpa %s11, 0
    loop: start=0, step=1, limit=4
    $region2: #{dense_hcn_conv.1} parent=1 // loop_pre_header
      _
    $region3: #{dense_hcn_conv.1} parent=1 // loop_header
      %s14 = sphi 0, %s18
      %p15 = scmp.ge.s32.totalorder %s14, 4
      %s24 = sphi 0, %s26
      %s27 = sphi 0, %s24
      %s28 = sphi 0, %s27
      %s44 = sphi 0, %s28
      %s50 = sphi 0, %s52
      %s53 = sphi 0, %s50
      %s54 = sphi 0, %s53
      %s70 = sphi 0, %s54
      %s74 = sphi 0, %s74
      %s76 = sphi 0, %s74
      %s77 = sphi 0, %s76
      %s91 = sphi 0, %s77
      %s95 = sphi 0, %s95
      %s97 = sphi 0, %s95
      %s98 = sphi 0, %s97
      %s112 = sphi 0, %s98
      %s118 = sphi 0, %s120
      %s121 = sphi 0, %s118
      %s122 = sphi 0, %s121
      %s138 = sphi 0, %s122
      %s144 = sphi 0, %s146
      %s147 = sphi 0, %s144
      %s148 = sphi 0, %s147
      %s164 = sphi 0, %s148
    $region4: #{dense_hcn_conv.1} parent=1 // loop_header_branch
      %17 = sbr.rel (%p15) target = $region8
    $region5: #{dense_hcn_conv.1} parent=1 // loop_body
      %s19 = ssub.s32 %s14, 1
      %s20 = ssub.s32 %s14, 2
      %s21 = sadd.s32 %s14, 1
      %s22 = ssub.s32 %s14, %s21
      %p23 = scmp.eq.s32.totalorder %s22, 0
      %s25 = sadd.s32 %s24, 1
      %s26 = scalar_select %p23, %s24, %s25
      %p29 = pneg %p23
      %p30 = scmp.eq.s32.totalorder %s14, 1
      %p31 = por %p29, %p30
      %p32 = scmp.ne.s32.totalorder %s24, %s27
      %p33 = scmp.eq.s32.totalorder %s14, 0
      %p34 = por %p32, %p33
      %p35 = scmp.ne.s32.totalorder %s24, %s27
      %p36 = scmp.eq.s32.totalorder %s19, 1
      %p37 = por %p35, %p36
      %p38 = scmp.ne.s32.totalorder %s27, %s28
      %p39 = scmp.eq.s32.totalorder %s19, 0
      %p40 = por %p38, %p39
      %p41 = scmp.ne.s32.totalorder %s27, %s28
      %p42 = scmp.eq.s32.totalorder %s20, 1
      %p43 = por %p41, %p42
      %p45 = scmp.ne.s32.totalorder %s28, %s44
      %p46 = scmp.eq.s32.totalorder %s20, 0
      %p47 = por %p45, %p46
      %s48 = ssub.s32 %s14, %s21
      %p49 = scmp.eq.s32.totalorder %s48, 0
      %s51 = sadd.s32 %s50, 1
      %s52 = scalar_select %p49, %s50, %s51
      %p55 = pneg %p49
      %p56 = scmp.eq.s32.totalorder %s14, 1
      %p57 = por %p55, %p56
      %p58 = scmp.ne.s32.totalorder %s50, %s53
      %p59 = scmp.eq.s32.totalorder %s14, 0
      %p60 = por %p58, %p59
      %p61 = scmp.ne.s32.totalorder %s50, %s53
      %p62 = scmp.eq.s32.totalorder %s19, 1
      %p63 = por %p61, %p62
      %p64 = scmp.ne.s32.totalorder %s53, %s54
      %p65 = scmp.eq.s32.totalorder %s19, 0
      %p66 = por %p64, %p65
      %p67 = scmp.ne.s32.totalorder %s53, %s54
      %p68 = scmp.eq.s32.totalorder %s20, 1
      %p69 = por %p67, %p68
      %p71 = scmp.ne.s32.totalorder %s54, %s70
      %p72 = scmp.eq.s32.totalorder %s20, 0
      %p73 = por %p71, %p72
      %s75 = sadd.s32 %s74, 1
      %p78 = scmp.eq.s32.totalorder %s14, 1
      %p79 = scmp.ne.s32.totalorder %s74, %s76
      %p80 = scmp.eq.s32.totalorder %s14, 0
      %p81 = por %p79, %p80
      %p82 = scmp.ne.s32.totalorder %s74, %s76
      %p83 = scmp.eq.s32.totalorder %s19, 1
      %p84 = por %p82, %p83
      %p85 = scmp.ne.s32.totalorder %s76, %s77
      %p86 = scmp.eq.s32.totalorder %s19, 0
      %p87 = por %p85, %p86
      %p88 = scmp.ne.s32.totalorder %s76, %s77
      %p89 = scmp.eq.s32.totalorder %s20, 1
      %p90 = por %p88, %p89
      %p92 = scmp.ne.s32.totalorder %s77, %s91
      %p93 = scmp.eq.s32.totalorder %s20, 0
      %p94 = por %p92, %p93
      %s96 = sadd.s32 %s95, 1
      %p99 = scmp.eq.s32.totalorder %s14, 1
      %p100 = scmp.ne.s32.totalorder %s95, %s97
      %p101 = scmp.eq.s32.totalorder %s14, 0
      %p102 = por %p100, %p101
      %p103 = scmp.ne.s32.totalorder %s95, %s97
      %p104 = scmp.eq.s32.totalorder %s19, 1
      %p105 = por %p103, %p104
      %p106 = scmp.ne.s32.totalorder %s97, %s98
      %p107 = scmp.eq.s32.totalorder %s19, 0
      %p108 = por %p106, %p107
      %p109 = scmp.ne.s32.totalorder %s97, %s98
      %p110 = scmp.eq.s32.totalorder %s20, 1
      %p111 = por %p109, %p110
      %p113 = scmp.ne.s32.totalorder %s98, %s112
      %p114 = scmp.eq.s32.totalorder %s20, 0
      %p115 = por %p113, %p114
      %s116 = ssub.s32 %s14, %s21
      %p117 = scmp.eq.s32.totalorder %s116, 0
      %s119 = sadd.s32 %s118, 1
      %s120 = scalar_select %p117, %s118, %s119
      %p123 = pneg %p117
      %p124 = scmp.eq.s32.totalorder %s14, 1
      %p125 = por %p123, %p124
      %p126 = scmp.ne.s32.totalorder %s118, %s121
      %p127 = scmp.eq.s32.totalorder %s14, 0
      %p128 = por %p126, %p127
      %p129 = scmp.ne.s32.totalorder %s118, %s121
      %p130 = scmp.eq.s32.totalorder %s19, 1
      %p131 = por %p129, %p130
      %p132 = scmp.ne.s32.totalorder %s121, %s122
      %p133 = scmp.eq.s32.totalorder %s19, 0
      %p134 = por %p132, %p133
      %p135 = scmp.ne.s32.totalorder %s121, %s122
      %p136 = scmp.eq.s32.totalorder %s20, 1
      %p137 = por %p135, %p136
      %p139 = scmp.ne.s32.totalorder %s122, %s138
      %p140 = scmp.eq.s32.totalorder %s20, 0
      %p141 = por %p139, %p140
      %s142 = ssub.s32 %s14, %s21
      %p143 = scmp.eq.s32.totalorder %s142, 0
      %s145 = sadd.s32 %s144, 1
      %s146 = scalar_select %p143, %s144, %s145
      %p149 = pneg %p143
      %p150 = scmp.eq.s32.totalorder %s14, 1
      %p151 = por %p149, %p150
      %p152 = scmp.ne.s32.totalorder %s144, %s147
      %p153 = scmp.eq.s32.totalorder %s14, 0
      %p154 = por %p152, %p153
      %p155 = scmp.ne.s32.totalorder %s144, %s147
      %p156 = scmp.eq.s32.totalorder %s19, 1
      %p157 = por %p155, %p156
      %p158 = scmp.ne.s32.totalorder %s147, %s148
      %p159 = scmp.eq.s32.totalorder %s19, 0
      %p160 = por %p158, %p159
      %p161 = scmp.ne.s32.totalorder %s147, %s148
      %p162 = scmp.eq.s32.totalorder %s20, 1
      %p163 = por %p161, %p162
      %p165 = scmp.ne.s32.totalorder %s148, %s164
      %p166 = scmp.eq.s32.totalorder %s20, 0
      %p167 = por %p165, %p166
      %p168 = scmp.le.s32.totalorder 1, %s14
      %p169 = scmp.lt.s32.totalorder %s14, 3
      %p170 = pnand %p168, %p169
      %p171 = pneg %p170
      // Predicated region
      $region9: #{dense_hcn_conv.1} parent=5 // pred_check
        _
      $region10: #{dense_hcn_conv.1} parent=5 // pred_check_branch
        %173 = sbr.rel (%p170) target = $region12
      $region11: #{dense_hcn_conv.1} parent=5 // pred_region
        %s174 = ssub.s32 %s14, 1
        // Predicated region
        $region13: #{dense_hcn_conv.1} parent=11 // pred_check
          %p175 = pneg %p87
        $region14: #{dense_hcn_conv.1} parent=11 // pred_check_branch
          %177 = sbr.rel (%p175) target = $region16
        $region15: #{dense_hcn_conv.1} parent=11 // pred_region
          _
        $region16: #{dense_hcn_conv.1} parent=11 // pred_fallthru
          _
        // Predicated region
        $region17: #{dense_hcn_conv.1} parent=11 // pred_check
          %p178 = pneg %p108
        $region18: #{dense_hcn_conv.1} parent=11 // pred_check_branch
          %180 = sbr.rel (%p178) target = $region20
        $region19: #{dense_hcn_conv.1} parent=11 // pred_region
          _
        $region20: #{dense_hcn_conv.1} parent=11 // pred_fallthru
          _
      $region12: #{dense_hcn_conv.1} parent=5 // pred_fallthru
        _
      %p181 = scmp.lt.s32.totalorder %s14, 2
      // Predicated region
      $region21: #{dense_hcn_conv.1} parent=5 // pred_check
        %p182 = pneg %p181
      $region22: #{dense_hcn_conv.1} parent=5 // pred_check_branch
        %184 = sbr.rel (%p182) target = $region24
      $region23: #{dense_hcn_conv.1} parent=5 // pred_region
        // Predicated region
        $region25: #{dense_hcn_conv.1} parent=23 // pred_check
          %p185 = pneg %p34
        $region26: #{dense_hcn_conv.1} parent=23 // pred_check_branch
          %187 = sbr.rel (%p185) target = $region28
        $region27: #{dense_hcn_conv.1} parent=23 // pred_region
          %p188 = scmp.lt.s32.totalorder %s14, 1
          %s189 = scalar_select %p188, %s14, 1
          %s190 = smul.addr %s189, 2
          %s191 = smul.addr %s190, 8
          %s192 = scalar_lea.vmem %s0, %s191
        $region28: #{dense_hcn_conv.1} parent=23 // pred_fallthru
          _
        // Predicated region
        $region29: #{dense_hcn_conv.1} parent=23 // pred_check
          %p193 = pneg %p60
        $region30: #{dense_hcn_conv.1} parent=23 // pred_check_branch
          %195 = sbr.rel (%p193) target = $region32
        $region31: #{dense_hcn_conv.1} parent=23 // pred_region
          %p196 = scmp.lt.s32.totalorder %s14, 1
          %s197 = scalar_select %p196, %s14, 1
          %s198 = smul.addr %s197, 2
          %s199 = smul.addr %s198, 8
          %s200 = scalar_lea.vmem %s1, %s199
        $region32: #{dense_hcn_conv.1} parent=23 // pred_fallthru
          _
        // Predicated region
        $region33: #{dense_hcn_conv.1} parent=23 // pred_check
          %p201 = pneg %p128
        $region34: #{dense_hcn_conv.1} parent=23 // pred_check_branch
          %203 = sbr.rel (%p201) target = $region36
        $region35: #{dense_hcn_conv.1} parent=23 // pred_region
          %p204 = scmp.lt.s32.totalorder %s14, 1
          %s205 = scalar_select %p204, %s14, 1
          %s206 = smul.addr %s205, 2
          %s207 = smul.addr %s206, 8
          %s208 = scalar_lea.vmem %s4, %s207
        $region36: #{dense_hcn_conv.1} parent=23 // pred_fallthru
          _
      $region24: #{dense_hcn_conv.1} parent=5 // pred_fallthru
        _
      %p209 = scmp.le.s32.totalorder 1, %s14
      %p210 = scmp.lt.s32.totalorder %s14, 3
      %p211 = pnand %p209, %p210
      %p212 = pneg %p211
      // Predicated region
      $region37: #{dense_hcn_conv.1} parent=5 // pred_check
        _
      $region38: #{dense_hcn_conv.1} parent=5 // pred_check_branch
        %214 = sbr.rel (%p211) target = $region40
      $region39: #{dense_hcn_conv.1} parent=5 // pred_region
        %s215 = ssub.s32 %s14, 1
        %p216 = scmp.lt.s32.totalorder %s19, 1
        %s217 = scalar_select %p216, %s19, 1
        %s218 = smul.addr %s217, 2
        %s219 = smul.addr %s218, 8
        %s220 = scalar_lea.vmem %s0, %s219
        %p221 = pneg %p40
        %p222 = pneg %p37
        %p223 = scmp.lt.s32.totalorder %s19, 1
        %s224 = scalar_select %p223, %s19, 1
        %s225 = smul.addr %s224, 2
        %s226 = smul.addr %s225, 8
        %s227 = scalar_lea.vmem %s1, %s226
        %p228 = pneg %p66
        %p229 = pneg %p63
        %p230 = pneg %p87
        %p231 = pneg %p84
        %p232 = pneg %p108
        %p233 = pneg %p105
        %p234 = scmp.lt.s32.totalorder %s19, 1
        %s235 = scalar_select %p234, %s19, 1
        %s236 = smul.addr %s235, 2
        %s237 = smul.addr %s236, 8
        %s238 = scalar_lea.vmem %s4, %s237
        %p239 = pneg %p134
        %p240 = pneg %p131
        %p241 = pneg %p160
        %p242 = pneg %p157
        %s243 = sand.u32 %s147, 1
        %s244 = scalar_lea.sflag [#allocation3], %s243
        %s245 = sand.u32 %s147, 1
        %s246 = smul.addr %s245, 16
        %s247 = scalar_lea.vmem [#allocation2], %s246
        %p248 = scmp.lt.s32.totalorder %s19, 1
        %s249 = scalar_select %p248, %s19, 1
        %s250 = smul.addr %s249, 2
        %s251 = smul.addr %s250, 8
        %s252 = scalar_lea.vmem %s0, %s251
        %p253 = scmp.lt.s32.totalorder %s19, 1
        %s254 = scalar_select %p253, %s19, 1
        %s255 = smul.addr %s254, 2
        %s256 = smul.addr %s255, 8
        %s257 = scalar_lea.vmem %s1, %s256
        %p258 = scmp.lt.s32.totalorder %s19, 1
        %s259 = scalar_select %p258, %s19, 1
        %s260 = smul.addr %s259, 2
        %s261 = smul.addr %s260, 8
        %s262 = scalar_lea.vmem %s4, %s261
        %v263 = vld [vmem:[%s252] sm:$0xff]
        %v264 = vld [vmem:[%s252 + $0x8] sm:$0xff]
        %v265 = vld [vmem:[%s257] sm:$0xff]
        %v266 = vld [vmem:[%s257 + $0x8] sm:$0xff]
        %v267 = vld [vmem:[%s2] sm:$0xff]
        %v268 = vld [vmem:[%s3] sm:$0x1]
        %vm269 = vcmask 64512
        %v271 = vsel %vm269, %v265, 0
        %v274 = vsel %vm269, %v266, 0
        %276 = vmatprep.subr.mxu0 0.0
        %277 = vmatpush1.msra.mxu0 %v267
        %278 = vmatprep.subr.mxu0 0.0
        %279 = vmatpush1.msra.mxu0 0.0
        %280 = vmatprep.subr.mxu0 0.0
        %281 = vmatpush1.msra.mxu0 0.0
        %282 = vmatprep.subr.mxu0 0.0
        %283 = vmatpush1.msra.mxu0 0.0
        %284 = vmatprep.subr.mxu0 0.0
        %285 = vmatpush1.msra.mxu0 0.0
        %286 = vmatprep.subr.mxu0 0.0
        %287 = vmatpush1.msra.mxu0 0.0
        %288 = vmatprep.subr.mxu0 0.0
        %289 = vmatpush1.msra.mxu0 0.0
        %290 = vmatprep.subr.mxu0 0.0
        %291 = vmatpush1.msra.mxu0 0.0
        %292 = vmatprep.subr.mxu0 0.0
        %293 = vmatpush1.msra.mxu0 0.0
        %294 = vmatprep.subr.mxu0 0.0
        %295 = vmatpush1.msra.mxu0 0.0
        %296 = vmatprep.subr.mxu0 0.0
        %297 = vmatpush1.msra.mxu0 0.0
        %298 = vmatprep.subr.mxu0 0.0
        %299 = vmatpush1.msra.mxu0 0.0
        %300 = vmatprep.subr.mxu0 0.0
        %301 = vmatpush1.msra.mxu0 0.0
        %302 = vmatprep.subr.mxu0 0.0
        %303 = vmatpush1.msra.mxu0 0.0
        %304 = vmatprep.subr.mxu0 0.0
        %305 = vmatpush1.msra.mxu0 0.0
        %306 = vmatprep.subr.mxu0 0.0
        %307 = vmatpush1.msra.mxu0 0.0
        %308 = vmatprep.subr.mxu0 0.0
        %309 = vmatpush1.msra.mxu0 0.0
        %310 = vmatprep.subr.mxu0 0.0
        %311 = vmatpush1.msra.mxu0 0.0
        %312 = vmatprep.subr.mxu0 0.0
        %313 = vmatpush1.msra.mxu0 0.0
        %314 = vmatprep.subr.mxu0 0.0
        %315 = vmatpush1.msra.mxu0 0.0
        %316 = vmatprep.subr.mxu0 0.0
        %317 = vmatpush1.msra.mxu0 0.0
        %318 = vmatprep.subr.mxu0 0.0
        %319 = vmatpush1.msra.mxu0 0.0
        %320 = vmatprep.subr.mxu0 0.0
        %321 = vmatpush1.msra.mxu0 0.0
        %322 = vmatprep.subr.mxu0 0.0
        %323 = vmatpush1.msra.mxu0 0.0
        %324 = vmatprep.subr.mxu0 0.0
        %325 = vmatpush1.msra.mxu0 0.0
        %326 = vmatprep.subr.mxu0 0.0
        %327 = vmatpush1.msra.mxu0 0.0
        %328 = vmatprep.subr.mxu0 0.0
        %329 = vmatpush1.msra.mxu0 0.0
        %330 = vmatprep.subr.mxu0 0.0
        %331 = vmatpush1.msra.mxu0 0.0
        %332 = vmatprep.subr.mxu0 0.0
        %333 = vmatpush1.msra.mxu0 0.0
        %334 = vmatprep.subr.mxu0 0.0
        %335 = vmatpush1.msra.mxu0 0.0
        %336 = vmatprep.subr.mxu0 0.0
        %337 = vmatpush1.msra.mxu0 0.0
        %338 = vmatprep.subr.mxu0 0.0
        %339 = vmatpush1.msra.mxu0 0.0
        %340 = vmatprep.mubr.f32.mxu0 0.0
        %341 = vmatmul.mubr.f32.gmra.mrb[0].mxu0 %v271
        %v342 = vpop.f32.mrb[0].mxu0
        %v343 = vadd.f32 0.0, %v342
        %v344 = vpop.f32.mrb[0].mxu0
        %345 = vmatprep.mubr.f32.mxu0 0.0
        %346 = vmatmul.mubr.f32.gmra.mrb[0].mxu0 %v274
        %v347 = vpop.f32.mrb[0].mxu0
        %v348 = vadd.f32 0.0, %v347
        %v349 = vpop.f32.mrb[0].mxu0
        %350 = vdwg.mxu0
        %vm351 = vcmask 130048
        %v352 = vsel %vm351, %v263, 0.0
        %353 = vadd.xlane.f32.xlu0 %v352
        %v354 = vpop.xlane.xlu0 %353
        %v355 = vsel %vm351, %v264, 0.0
        %356 = vadd.xlane.f32.xlu0 %v355
        %v357 = vpop.xlane.xlu0 %356
        %v358 = vmax.f32 %v354, 1.0
        %v359 = vmax.f32 %v357, 1.0
        %v360 = vrsqrt.pop %v358
        %v361 = vrsqrt.pop %v359
        %v362 = vmul.f32 %v343, %v360
        %v363 = vmul.f32 %v348, %v361
        %v365 = vsel %vm351, %v263, 0
        %v368 = vsel %vm351, %v264, 0
        %370 = vmatprep.subr.mxu0 0.0
        %371 = vmatpush1.msra.mxu0 %v362
        %372 = vmatprep.subr.mxu0 0.0
        %373 = vmatpush1.msra.mxu0 %v363
        %374 = vmatprep.subr.mxu0 0.0
        %375 = vmatpush1.msra.mxu0 0.0
        %376 = vmatprep.subr.mxu0 0.0
        %377 = vmatpush1.msra.mxu0 0.0
        %378 = vmatprep.subr.mxu0 0.0
        %379 = vmatpush1.msra.mxu0 0.0
        %380 = vmatprep.subr.mxu0 0.0
        %381 = vmatpush1.msra.mxu0 0.0
        %382 = vmatprep.subr.mxu0 0.0
        %383 = vmatpush1.msra.mxu0 0.0
        %384 = vmatprep.subr.mxu0 0.0
        %385 = vmatpush1.msra.mxu0 0.0
        %386 = vmatprep.subr.mxu0 0.0
        %387 = vmatpush1.msra.mxu0 0.0
        %388 = vmatprep.subr.mxu0 0.0
        %389 = vmatpush1.msra.mxu0 0.0
        %390 = vmatprep.subr.mxu0 0.0
        %391 = vmatpush1.msra.mxu0 0.0
        %392 = vmatprep.subr.mxu0 0.0
        %393 = vmatpush1.msra.mxu0 0.0
        %394 = vmatprep.subr.mxu0 0.0
        %395 = vmatpush1.msra.mxu0 0.0
        %396 = vmatprep.subr.mxu0 0.0
        %397 = vmatpush1.msra.mxu0 0.0
        %398 = vmatprep.subr.mxu0 0.0
        %399 = vmatpush1.msra.mxu0 0.0
        %400 = vmatprep.subr.mxu0 0.0
        %401 = vmatpush1.msra.mxu0 0.0
        %402 = vmatprep.subr.mxu0 0.0
        %403 = vmatpush1.msra.mxu0 0.0
        %404 = vmatprep.subr.mxu0 0.0
        %405 = vmatpush1.msra.mxu0 0.0
        %406 = vmatprep.subr.mxu0 0.0
        %407 = vmatpush1.msra.mxu0 0.0
        %408 = vmatprep.subr.mxu0 0.0
        %409 = vmatpush1.msra.mxu0 0.0
        %410 = vmatprep.subr.mxu0 0.0
        %411 = vmatpush1.msra.mxu0 0.0
        %412 = vmatprep.subr.mxu0 0.0
        %413 = vmatpush1.msra.mxu0 0.0
        %414 = vmatprep.subr.mxu0 0.0
        %415 = vmatpush1.msra.mxu0 0.0
        %416 = vmatprep.subr.mxu0 0.0
        %417 = vmatpush1.msra.mxu0 0.0
        %418 = vmatprep.subr.mxu0 0.0
        %419 = vmatpush1.msra.mxu0 0.0
        %420 = vmatprep.subr.mxu0 0.0
        %421 = vmatpush1.msra.mxu0 0.0
        %422 = vmatprep.subr.mxu0 0.0
        %423 = vmatpush1.msra.mxu0 0.0
        %424 = vmatprep.subr.mxu0 0.0
        %425 = vmatpush1.msra.mxu0 0.0
        %426 = vmatprep.subr.mxu0 0.0
        %427 = vmatpush1.msra.mxu0 0.0
        %428 = vmatprep.subr.mxu0 0.0
        %429 = vmatpush1.msra.mxu0 0.0
        %430 = vmatprep.subr.mxu0 0.0
        %431 = vmatpush1.msra.mxu0 0.0
        %432 = vmatprep.subr.mxu0 0.0
        %433 = vmatpush1.msra.mxu0 0.0
        %434 = vmatprep.mubr.f32.mxu0 0.0
        %435 = vmatmul.mubr.f32.gmra.mrb[0].mxu0 %v365
        %v436 = vpop.f32.mrb[0].mxu0
        %v437 = vadd.f32 0.0, %v436
        %v438 = vpop.f32.mrb[0].mxu0
        %439 = vmatprep.mubr.f32.mxu0 0.0
        %440 = vmatmul.mubr.f32.gmra.mrb[0].mxu0 %v368
        %v441 = vpop.f32.mrb[0].mxu0
        %v442 = vadd.f32 0.0, %v441
        %v443 = vpop.f32.mrb[0].mxu0
        %444 = vdwg.mxu0
        %v445 = vmul.f32 %v437, %v360
        %v446 = vmul.f32 %v442, %v361
        %v448 = vlaneseq
        %v449 = vshrl.u32 %v448, 7
        %v450 = vsub.s32 0, %v449
        %v451 = vrot.slane %v268, %v450
        %v453 = vadd.f32 %v445, %v451
        %v454 = vadd.f32 %v446, %v451
        %v455 = vld [vmem:[%s262] sm:$0xff]
        %v456 = vld [vmem:[%s262 + $0x8] sm:$0xff]
        %458 = vset.pattern.permute.xlu0 0
        %459 = vperm.xlu0 %458, %v455
        %v460 = vpop.permute.xlu0 %459
        %463 = vset.pattern.permute.xlu0 0
        %464 = vperm.xlu0 %463, %v456
        %v465 = vpop.permute.xlu0 %464
        %v467 = vmul.f32 %v453, %v460
        %v468 = vmul.f32 %v454, %v465
        %vm469 = vcmask 261120
        %470 = vst.msk [vmem:[%s247] sm:$0xff] %vm469, %v467
        %471 = vst.msk [vmem:[%s247 + $0x8] sm:$0xff] %vm469, %v468
        %s472 = sand.u32 %s147, 1
        %s473 = scalar_lea.sflag [#allocation3], %s472
        %s474 = sand.u32 %s147, 1
        %s475 = smul.addr %s474, 16
        %s476 = scalar_lea.vmem [#allocation2], %s475
        // Predicated region
        $region41: #{dense_hcn_conv.1} parent=39 // pred_check
          %p477 = pneg %p157
        $region42: #{dense_hcn_conv.1} parent=39 // pred_check_branch
          %479 = sbr.rel (%p477) target = $region44
        $region43: #{dense_hcn_conv.1} parent=39 // pred_region
          %s481 = ssub.s32 256, 256
          %482 = vsyncadd %s473, %s481
          %s483 = smul.addr %s19, 2
          %s484 = smul.addr %s483, 128
          %s485 = scalar_lea.hbm %s5, %s484
          %s486 = sshll.u32 %s476, 4
          %s487 = int_to_ptr.vmem [resolvable:$true] %s486
          %492 = dma.vmem_to_hbm [thread:$0]  %s487, 256, %s485, %s473, 128, 128, 8
        $region44: #{dense_hcn_conv.1} parent=39 // pred_fallthru
          _
      $region40: #{dense_hcn_conv.1} parent=5 // pred_fallthru
        _
      %p493 = scmp.le.s32.totalorder 2, %s14
      // Predicated region
      $region45: #{dense_hcn_conv.1} parent=5 // pred_check
        %p494 = pneg %p493
      $region46: #{dense_hcn_conv.1} parent=5 // pred_check_branch
        %496 = sbr.rel (%p494) target = $region48
      $region47: #{dense_hcn_conv.1} parent=5 // pred_region
        %s497 = ssub.s32 %s14, 2
        // Predicated region
        $region49: #{dense_hcn_conv.1} parent=47 // pred_check
          %p498 = pneg %p163
        $region50: #{dense_hcn_conv.1} parent=47 // pred_check_branch
          %500 = sbr.rel (%p498) target = $region52
        $region51: #{dense_hcn_conv.1} parent=47 // pred_region
          %s501 = sand.u32 %s148, 1
          %s502 = scalar_lea.sflag [#allocation3], %s501
          %s503 = sand.u32 %s148, 1
          %s504 = smul.addr %s503, 16
          %s505 = scalar_lea.vmem [#allocation2], %s504
          %506 = dma.done %s502, 256
        $region52: #{dense_hcn_conv.1} parent=47 // pred_fallthru
          _
      $region48: #{dense_hcn_conv.1} parent=5 // pred_fallthru
        _
    $region6: #{dense_hcn_conv.1} parent=1 // loop_footer
      %s18 = sadd.s32 1, %s14
    $region7: #{dense_hcn_conv.1} parent=1 // loop_footer_branch
      %13 = sbr.rel target = $region3
    $region8: #{dense_hcn_conv.1} parent=1 // loop_exit
      _
    %507 = vsyncpa [#allocation3], 1
    %s508 = scalar_lea.sflag [#allocation3], 1
    %509 = vsyncpa %s508, 1

</llo_original>
